<compile_context>
chip_gen: v6e
topology: v6e:2x2x1
jax: 0.10.0
libtpu: 0.0.40
codegen_flags: <defaults>
</compile_context>

<pallas_src>
import jax
import jax.numpy as jnp
from jax.experimental import pallas as pl
from jax.experimental.pallas import tpu as pltpu

H = 10          # logical hidden size (BayesianLSTM out_features)
GH = 32         # per-gate padded width == padded hidden width (4*GH = one lane tile)
G4 = 4 * GH     # fused gate width: [ i | f | o | g ] = 128 lanes
IN_FEAT = 1     # LSTM input features


# ----------------------------------------------------------------------------
# Pallas kernel: LSTM recurrence (single 128-lane fused gate tile) + linear head.
# ----------------------------------------------------------------------------
def nn_kernel(xw_ref,     # (T, TB, 128) f32: precomputed x_t @ W_ih + b, gate-packed
              whh_ref,    # (GH, 128)    f32: fused hidden->hidden weight
              wlin_ref,   # (1, GH)      f32: final linear weight (row)
              blin_ref,   # (1, 1)       f32 in SMEM: final linear bias
              out_ref):   # (TB, 1)      f32: output
    T = xw_ref.shape[0]
    TB = xw_ref.shape[1]

    # Loop-invariant fused recurrent weight: (32, 128) f32 = 4 vregs, loaded once.
    whh = whh_ref[...]

    def step(t, carry):
        h, c = carry                                              # (TB, GH) each
        # One fused (TB,32)@(32,128) MXU matmul + precomputed input contribution.
        z = xw_ref[t] + jnp.dot(h, whh, preferred_element_type=jnp.float32)
        # Sigmoid over the whole 128-lane tile (i|f|o lanes used), tanh on g only.
        s = jax.nn.sigmoid(z)                                     # (TB, 128)
        i_t = s[:, 0 * GH:1 * GH]
        f_t = s[:, 1 * GH:2 * GH]
        o_t = s[:, 2 * GH:3 * GH]
        g_t = jnp.tanh(z[:, 3 * GH:4 * GH])                       # (TB, GH)
        c_new = f_t * c + i_t * g_t
        h_new = o_t * jnp.tanh(c_new)
        return h_new, c_new

    # h / c live in vregs as loop carries; T is static and small -> unroll so
    # the LLO scheduler can overlap across steps.
    h0 = jnp.zeros((TB, GH), jnp.float32)
    c0 = jnp.zeros((TB, GH), jnp.float32)
    h_last, _ = jax.lax.fori_loop(0, T, step, (h0, c0), unroll=True)

    # Linear(10 -> 1): lane reduction over the (zero-padded) hidden lanes.
    out_ref[...] = (jnp.sum(h_last * wlin_ref[...], axis=-1, keepdims=True)
                    + blin_ref[0, 0])


# ----------------------------------------------------------------------------
# Wrapper: pack / pad parameters, precompute input contribution, call kernel.
# ----------------------------------------------------------------------------
def nn_forward(x, w_ih, w_hh, b, w_lin, b_lin):
    """x: (B, T, 1); w_ih: (1, 4H); w_hh: (H, 4H); b: (4H,);
    w_lin: (1, H) [torch Linear weight, (out,in)]; b_lin: (1,).

    Monte-Carlo sampling note: stacking MC samples / sequences along the batch
    dimension of `x` is the intended throughput lever — the batch grid axis
    below is marked "parallel" so large batches shard across TensorCores.
    """
    x = x.astype(jnp.float32)
    B, T, _ = x.shape

    # Batch padding / tiling: pad to a sublane multiple; tile at 256 rows when
    # the (MC-)batch is large so per-step VMEM residency stays bounded (v7x).
    BP = max(8, ((B + 7) // 8) * 8)
    if BP > 256:
        TILE_B = 256
        BP = ((BP + TILE_B - 1) // TILE_B) * TILE_B
    else:
        TILE_B = BP

    # Gate packing inside the single 128-lane tile: i, f, o, g (sigmoid gates
    # contiguous first, tanh gate last). blitz/torch column order is i, f, g, o.
    GATE_ORDER = (0, 1, 3, 2)

    def gate_chunk(a, g):                                   # (..., 4H) -> (..., H)
        return a[..., g * H:(g + 1) * H]

    def pad_gate(a):                                        # last dim H -> GH
        pad = [(0, 0)] * (a.ndim - 1) + [(0, GH - H)]
        return jnp.pad(a, pad)

    # Input contribution (independent of h) hoisted off the recurrent path.
    xw = x @ w_ih.astype(jnp.float32) + b.astype(jnp.float32)    # (B, T, 4H)
    xw = jnp.transpose(xw, (1, 0, 2))                            # (T, B, 4H)
    xw = jnp.pad(xw, ((0, 0), (0, BP - B), (0, 0)))              # (T, BP, 4H)
    xw_p = jnp.concatenate([pad_gate(gate_chunk(xw, g)) for g in GATE_ORDER],
                           axis=-1)                              # (T, BP, 128)

    # Fused hidden->hidden weight, gate-packed and zero-padded: (GH, 128).
    whh = w_hh.astype(jnp.float32)                               # (H, 4H)
    whh_p = jnp.concatenate([pad_gate(gate_chunk(whh, g)) for g in GATE_ORDER],
                            axis=-1)                             # (H, 128)
    whh_p = jnp.pad(whh_p, ((0, GH - H), (0, 0)))                # (GH, 128)

    wlin_p = jnp.pad(w_lin.astype(jnp.float32), ((0, 0), (0, GH - H)))  # (1, GH)
    blin_p = b_lin.reshape(1, 1).astype(jnp.float32)                    # (1, 1)

    out = pl.pallas_call(
        nn_kernel,
        out_shape=jax.ShapeDtypeStruct((BP, 1), jnp.float32),
        grid=(BP // TILE_B,),
        in_specs=[
            pl.BlockSpec((T, TILE_B, G4), lambda bt: (0, bt, 0)),
            pl.BlockSpec((GH, G4), lambda bt: (0, 0)),
            pl.BlockSpec((1, GH), lambda bt: (0, 0)),
            pl.BlockSpec(memory_space=pltpu.MemorySpace.SMEM),
        ],
        out_specs=pl.BlockSpec((TILE_B, 1), lambda bt: (bt, 0)),
        compiler_params=pltpu.CompilerParams(
            dimension_semantics=("parallel",)),
    )(xw_p, whh_p, wlin_p, blin_p)

    return out[:B]


# ----------------------------------------------------------------------------
# Plain-JAX reference (mirrors blitz BayesianLSTM forward_ semantics).
# ----------------------------------------------------------------------------
def ref_forward(x, w_ih, w_hh, b, w_lin, b_lin):
    B, T, _ = x.shape
    h = jnp.zeros((B, H), jnp.float32)
    c = jnp.zeros((B, H), jnp.float32)
    for t in range(T):
        x_t = x[:, t, :]
        gates = x_t @ w_ih + h @ w_hh + b
        i = jax.nn.sigmoid(gates[:, :H])
        f = jax.nn.sigmoid(gates[:, H:2 * H])
        g = jnp.tanh(gates[:, 2 * H:3 * H])
        o = jax.nn.sigmoid(gates[:, 3 * H:])
        c = f * c + i * g
        h = o * jnp.tanh(c)
    return h @ w_lin.T + b_lin


# ----------------------------------------------------------------------------
# Deterministic parameter "sampling" (variational reparameterization trick).
# ----------------------------------------------------------------------------
def sample_bayesian_weight(key, shape, posterior_rho_init=-3.0):
    k_mu, k_rho, k_eps = jax.random.split(key, 3)
    mu = 0.1 * jax.random.normal(k_mu, shape, jnp.float32)
    rho = posterior_rho_init + 0.1 * jax.random.normal(k_rho, shape, jnp.float32)
    sigma = jnp.log1p(jnp.exp(rho))
    eps = jax.random.normal(k_eps, shape, jnp.float32)
    return mu + sigma * eps


if __name__ == "__main__":
    key = jax.random.PRNGKey(0)
    k_x, k_ih, k_hh, k_b, k_lw, k_lb = jax.random.split(key, 6)

    B, T = 2, 8
    x = jax.random.normal(k_x, (B, T, IN_FEAT), jnp.float32)

    # BayesianLSTM(1, 10): weight_ih (1, 40), weight_hh (10, 40), bias (40,)
    w_ih = sample_bayesian_weight(k_ih, (IN_FEAT, 4 * H))
    w_hh = sample_bayesian_weight(k_hh, (H, 4 * H))
    b = sample_bayesian_weight(k_b, (4 * H,))

    # nn.Linear(10, 1): weight (1, 10), bias (1,)  (torch default uniform init)
    bound = 1.0 / jnp.sqrt(float(H))
    w_lin = jax.random.uniform(k_lw, (1, H), jnp.float32, -bound, bound)
    b_lin = jax.random.uniform(k_lb, (1,), jnp.float32, -bound, bound)

    y = nn_forward(x, w_ih, w_hh, b, w_lin, b_lin)
    y = jax.block_until_ready(y)

    y_ref = ref_forward(x, w_ih, w_hh, b, w_lin, b_lin)
    assert y.shape == (B, 1)
    assert jnp.allclose(y, y_ref, atol=1e-3, rtol=1e-3), (y, y_ref)

    print("KERNEL_OK")
</pallas_src>

<mosaic_0001>
module attributes {stable_mosaic.version = 11 : i64} {
  func.func @nn_kernel(%arg0: i32, %arg1: memref<8x8x128xf32, #tpu.memory_space<vmem>>, %arg2: memref<32x128xf32, #tpu.memory_space<vmem>>, %arg3: memref<1x32xf32, #tpu.memory_space<vmem>>, %arg4: memref<1x1xf32, #tpu.memory_space<smem>>, %arg5: memref<8x1xf32, #tpu.memory_space<vmem>>) attributes {dimension_semantics = [#tpu.dimension_semantics<parallel>], iteration_bounds = array<i64: 1>, scalar_prefetch = 0 : i64, scratch_operands = 0 : i64, tpu.core_type = #tpu.core_type<tc>, window_params = [{transform_indices = @transform_0, window_bounds = array<i64: 8, 8, 128>}, {pipeline_mode = #tpu.pipeline_mode<synchronous>, transform_indices = @transform_1, window_bounds = array<i64: 32, 128>}, {pipeline_mode = #tpu.pipeline_mode<synchronous>, transform_indices = @transform_2, window_bounds = array<i64: 1, 32>}, {transform_indices = @transform_3, window_bounds = array<i64: 1, 1>}, {transform_indices = @transform_4, window_bounds = array<i64: 8, 1>}]} {
    %c0 = arith.constant 0 : index
    %c0_0 = arith.constant 0 : index
    %0 = vector.load %arg2[%c0, %c0_0] : memref<32x128xf32, #tpu.memory_space<vmem>>, vector<32x128xf32>
    %cst = arith.constant 0.000000e+00 : f32
    %1 = vector.broadcast %cst : f32 to vector<8x32xf32>
    %cst_1 = arith.constant 0.000000e+00 : f32
    %2 = vector.broadcast %cst_1 : f32 to vector<8x32xf32>
    %c0_i32 = arith.constant 0 : i32
    %3 = arith.index_cast %c0_i32 : i32 to index
    %c0_2 = arith.constant 0 : index
    %c0_3 = arith.constant 0 : index
    %4 = vector.load %arg1[%3, %c0_2, %c0_3] : memref<8x8x128xf32, #tpu.memory_space<vmem>>, vector<1x8x128xf32>
    %5 = vector.shape_cast %4 : vector<1x8x128xf32> to vector<8x128xf32>
    %cst_4 = arith.constant dense<0.000000e+00> : vector<8x128xf32>
    %6 = tpu.matmul %1, %0, %cst_4 {dimension_numbers = #tpu.dot_dimension_numbers<[1], [0], [0], [1], [0, 0, 1, 1], [], []>} : vector<8x32xf32>, vector<32x128xf32>, vector<8x128xf32> -> vector<8x128xf32>
    %7 = arith.addf %5, %6 : vector<8x128xf32>
    %8 = arith.negf %7 : vector<8x128xf32>
    %9 = math.exp %8 : vector<8x128xf32>
    %cst_5 = arith.constant 1.000000e+00 : f32
    %10 = vector.broadcast %cst_5 : f32 to vector<8x128xf32>
    %11 = arith.addf %10, %9 : vector<8x128xf32>
    %12 = arith.divf %10, %11 : vector<8x128xf32>
    %13 = vector.extract_strided_slice %12 {offsets = [0, 0], sizes = [8, 32], strides = [1, 1]} : vector<8x128xf32> to vector<8x32xf32>
    %14 = vector.extract_strided_slice %12 {offsets = [0, 32], sizes = [8, 32], strides = [1, 1]} : vector<8x128xf32> to vector<8x32xf32>
    %15 = vector.extract_strided_slice %12 {offsets = [0, 64], sizes = [8, 32], strides = [1, 1]} : vector<8x128xf32> to vector<8x32xf32>
    %16 = vector.extract_strided_slice %7 {offsets = [0, 96], sizes = [8, 32], strides = [1, 1]} : vector<8x128xf32> to vector<8x32xf32>
    %17 = math.tanh %16 : vector<8x32xf32>
    %18 = arith.mulf %14, %2 : vector<8x32xf32>
    %19 = arith.mulf %13, %17 : vector<8x32xf32>
    %20 = arith.addf %18, %19 : vector<8x32xf32>
    %21 = math.tanh %20 : vector<8x32xf32>
    %22 = arith.mulf %15, %21 : vector<8x32xf32>
    %c1_i32 = arith.constant 1 : i32
    %23 = arith.index_cast %c1_i32 : i32 to index
    %c0_6 = arith.constant 0 : index
    %c0_7 = arith.constant 0 : index
    %24 = vector.load %arg1[%23, %c0_6, %c0_7] : memref<8x8x128xf32, #tpu.memory_space<vmem>>, vector<1x8x128xf32>
    %25 = vector.shape_cast %24 : vector<1x8x128xf32> to vector<8x128xf32>
    %cst_8 = arith.constant dense<0.000000e+00> : vector<8x128xf32>
    %26 = tpu.matmul %22, %0, %cst_8 {dimension_numbers = #tpu.dot_dimension_numbers<[1], [0], [0], [1], [0, 0, 1, 1], [], []>} : vector<8x32xf32>, vector<32x128xf32>, vector<8x128xf32> -> vector<8x128xf32>
    %27 = arith.addf %25, %26 : vector<8x128xf32>
    %28 = arith.negf %27 : vector<8x128xf32>
    %29 = math.exp %28 : vector<8x128xf32>
    %cst_9 = arith.constant 1.000000e+00 : f32
    %30 = vector.broadcast %cst_9 : f32 to vector<8x128xf32>
    %31 = arith.addf %30, %29 : vector<8x128xf32>
    %32 = arith.divf %30, %31 : vector<8x128xf32>
    %33 = vector.extract_strided_slice %32 {offsets = [0, 0], sizes = [8, 32], strides = [1, 1]} : vector<8x128xf32> to vector<8x32xf32>
    %34 = vector.extract_strided_slice %32 {offsets = [0, 32], sizes = [8, 32], strides = [1, 1]} : vector<8x128xf32> to vector<8x32xf32>
    %35 = vector.extract_strided_slice %32 {offsets = [0, 64], sizes = [8, 32], strides = [1, 1]} : vector<8x128xf32> to vector<8x32xf32>
    %36 = vector.extract_strided_slice %27 {offsets = [0, 96], sizes = [8, 32], strides = [1, 1]} : vector<8x128xf32> to vector<8x32xf32>
    %37 = math.tanh %36 : vector<8x32xf32>
    %38 = arith.mulf %34, %20 : vector<8x32xf32>
    %39 = arith.mulf %33, %37 : vector<8x32xf32>
    %40 = arith.addf %38, %39 : vector<8x32xf32>
    %41 = math.tanh %40 : vector<8x32xf32>
    %42 = arith.mulf %35, %41 : vector<8x32xf32>
    %c2_i32 = arith.constant 2 : i32
    %43 = arith.index_cast %c2_i32 : i32 to index
    %c0_10 = arith.constant 0 : index
    %c0_11 = arith.constant 0 : index
    %44 = vector.load %arg1[%43, %c0_10, %c0_11] : memref<8x8x128xf32, #tpu.memory_space<vmem>>, vector<1x8x128xf32>
    %45 = vector.shape_cast %44 : vector<1x8x128xf32> to vector<8x128xf32>
    %cst_12 = arith.constant dense<0.000000e+00> : vector<8x128xf32>
    %46 = tpu.matmul %42, %0, %cst_12 {dimension_numbers = #tpu.dot_dimension_numbers<[1], [0], [0], [1], [0, 0, 1, 1], [], []>} : vector<8x32xf32>, vector<32x128xf32>, vector<8x128xf32> -> vector<8x128xf32>
    %47 = arith.addf %45, %46 : vector<8x128xf32>
    %48 = arith.negf %47 : vector<8x128xf32>
    %49 = math.exp %48 : vector<8x128xf32>
    %cst_13 = arith.constant 1.000000e+00 : f32
    %50 = vector.broadcast %cst_13 : f32 to vector<8x128xf32>
    %51 = arith.addf %50, %49 : vector<8x128xf32>
    %52 = arith.divf %50, %51 : vector<8x128xf32>
    %53 = vector.extract_strided_slice %52 {offsets = [0, 0], sizes = [8, 32], strides = [1, 1]} : vector<8x128xf32> to vector<8x32xf32>
    %54 = vector.extract_strided_slice %52 {offsets = [0, 32], sizes = [8, 32], strides = [1, 1]} : vector<8x128xf32> to vector<8x32xf32>
    %55 = vector.extract_strided_slice %52 {offsets = [0, 64], sizes = [8, 32], strides = [1, 1]} : vector<8x128xf32> to vector<8x32xf32>
    %56 = vector.extract_strided_slice %47 {offsets = [0, 96], sizes = [8, 32], strides = [1, 1]} : vector<8x128xf32> to vector<8x32xf32>
    %57 = math.tanh %56 : vector<8x32xf32>
    %58 = arith.mulf %54, %40 : vector<8x32xf32>
    %59 = arith.mulf %53, %57 : vector<8x32xf32>
    %60 = arith.addf %58, %59 : vector<8x32xf32>
    %61 = math.tanh %60 : vector<8x32xf32>
    %62 = arith.mulf %55, %61 : vector<8x32xf32>
    %c3_i32 = arith.constant 3 : i32
    %63 = arith.index_cast %c3_i32 : i32 to index
    %c0_14 = arith.constant 0 : index
    %c0_15 = arith.constant 0 : index
    %64 = vector.load %arg1[%63, %c0_14, %c0_15] : memref<8x8x128xf32, #tpu.memory_space<vmem>>, vector<1x8x128xf32>
    %65 = vector.shape_cast %64 : vector<1x8x128xf32> to vector<8x128xf32>
    %cst_16 = arith.constant dense<0.000000e+00> : vector<8x128xf32>
    %66 = tpu.matmul %62, %0, %cst_16 {dimension_numbers = #tpu.dot_dimension_numbers<[1], [0], [0], [1], [0, 0, 1, 1], [], []>} : vector<8x32xf32>, vector<32x128xf32>, vector<8x128xf32> -> vector<8x128xf32>
    %67 = arith.addf %65, %66 : vector<8x128xf32>
    %68 = arith.negf %67 : vector<8x128xf32>
    %69 = math.exp %68 : vector<8x128xf32>
    %cst_17 = arith.constant 1.000000e+00 : f32
    %70 = vector.broadcast %cst_17 : f32 to vector<8x128xf32>
    %71 = arith.addf %70, %69 : vector<8x128xf32>
    %72 = arith.divf %70, %71 : vector<8x128xf32>
    %73 = vector.extract_strided_slice %72 {offsets = [0, 0], sizes = [8, 32], strides = [1, 1]} : vector<8x128xf32> to vector<8x32xf32>
    %74 = vector.extract_strided_slice %72 {offsets = [0, 32], sizes = [8, 32], strides = [1, 1]} : vector<8x128xf32> to vector<8x32xf32>
    %75 = vector.extract_strided_slice %72 {offsets = [0, 64], sizes = [8, 32], strides = [1, 1]} : vector<8x128xf32> to vector<8x32xf32>
    %76 = vector.extract_strided_slice %67 {offsets = [0, 96], sizes = [8, 32], strides = [1, 1]} : vector<8x128xf32> to vector<8x32xf32>
    %77 = math.tanh %76 : vector<8x32xf32>
    %78 = arith.mulf %74, %60 : vector<8x32xf32>
    %79 = arith.mulf %73, %77 : vector<8x32xf32>
    %80 = arith.addf %78, %79 : vector<8x32xf32>
    %81 = math.tanh %80 : vector<8x32xf32>
    %82 = arith.mulf %75, %81 : vector<8x32xf32>
    %c4_i32 = arith.constant 4 : i32
    %83 = arith.index_cast %c4_i32 : i32 to index
    %c0_18 = arith.constant 0 : index
    %c0_19 = arith.constant 0 : index
    %84 = vector.load %arg1[%83, %c0_18, %c0_19] : memref<8x8x128xf32, #tpu.memory_space<vmem>>, vector<1x8x128xf32>
    %85 = vector.shape_cast %84 : vector<1x8x128xf32> to vector<8x128xf32>
    %cst_20 = arith.constant dense<0.000000e+00> : vector<8x128xf32>
    %86 = tpu.matmul %82, %0, %cst_20 {dimension_numbers = #tpu.dot_dimension_numbers<[1], [0], [0], [1], [0, 0, 1, 1], [], []>} : vector<8x32xf32>, vector<32x128xf32>, vector<8x128xf32> -> vector<8x128xf32>
    %87 = arith.addf %85, %86 : vector<8x128xf32>
    %88 = arith.negf %87 : vector<8x128xf32>
    %89 = math.exp %88 : vector<8x128xf32>
    %cst_21 = arith.constant 1.000000e+00 : f32
    %90 = vector.broadcast %cst_21 : f32 to vector<8x128xf32>
    %91 = arith.addf %90, %89 : vector<8x128xf32>
    %92 = arith.divf %90, %91 : vector<8x128xf32>
    %93 = vector.extract_strided_slice %92 {offsets = [0, 0], sizes = [8, 32], strides = [1, 1]} : vector<8x128xf32> to vector<8x32xf32>
    %94 = vector.extract_strided_slice %92 {offsets = [0, 32], sizes = [8, 32], strides = [1, 1]} : vector<8x128xf32> to vector<8x32xf32>
    %95 = vector.extract_strided_slice %92 {offsets = [0, 64], sizes = [8, 32], strides = [1, 1]} : vector<8x128xf32> to vector<8x32xf32>
    %96 = vector.extract_strided_slice %87 {offsets = [0, 96], sizes = [8, 32], strides = [1, 1]} : vector<8x128xf32> to vector<8x32xf32>
    %97 = math.tanh %96 : vector<8x32xf32>
    %98 = arith.mulf %94, %80 : vector<8x32xf32>
    %99 = arith.mulf %93, %97 : vector<8x32xf32>
    %100 = arith.addf %98, %99 : vector<8x32xf32>
    %101 = math.tanh %100 : vector<8x32xf32>
    %102 = arith.mulf %95, %101 : vector<8x32xf32>
    %c5_i32 = arith.constant 5 : i32
    %103 = arith.index_cast %c5_i32 : i32 to index
    %c0_22 = arith.constant 0 : index
    %c0_23 = arith.constant 0 : index
    %104 = vector.load %arg1[%103, %c0_22, %c0_23] : memref<8x8x128xf32, #tpu.memory_space<vmem>>, vector<1x8x128xf32>
    %105 = vector.shape_cast %104 : vector<1x8x128xf32> to vector<8x128xf32>
    %cst_24 = arith.constant dense<0.000000e+00> : vector<8x128xf32>
    %106 = tpu.matmul %102, %0, %cst_24 {dimension_numbers = #tpu.dot_dimension_numbers<[1], [0], [0], [1], [0, 0, 1, 1], [], []>} : vector<8x32xf32>, vector<32x128xf32>, vector<8x128xf32> -> vector<8x128xf32>
    %107 = arith.addf %105, %106 : vector<8x128xf32>
    %108 = arith.negf %107 : vector<8x128xf32>
    %109 = math.exp %108 : vector<8x128xf32>
    %cst_25 = arith.constant 1.000000e+00 : f32
    %110 = vector.broadcast %cst_25 : f32 to vector<8x128xf32>
    %111 = arith.addf %110, %109 : vector<8x128xf32>
    %112 = arith.divf %110, %111 : vector<8x128xf32>
    %113 = vector.extract_strided_slice %112 {offsets = [0, 0], sizes = [8, 32], strides = [1, 1]} : vector<8x128xf32> to vector<8x32xf32>
    %114 = vector.extract_strided_slice %112 {offsets = [0, 32], sizes = [8, 32], strides = [1, 1]} : vector<8x128xf32> to vector<8x32xf32>
    %115 = vector.extract_strided_slice %112 {offsets = [0, 64], sizes = [8, 32], strides = [1, 1]} : vector<8x128xf32> to vector<8x32xf32>
    %116 = vector.extract_strided_slice %107 {offsets = [0, 96], sizes = [8, 32], strides = [1, 1]} : vector<8x128xf32> to vector<8x32xf32>
    %117 = math.tanh %116 : vector<8x32xf32>
    %118 = arith.mulf %114, %100 : vector<8x32xf32>
    %119 = arith.mulf %113, %117 : vector<8x32xf32>
    %120 = arith.addf %118, %119 : vector<8x32xf32>
    %121 = math.tanh %120 : vector<8x32xf32>
    %122 = arith.mulf %115, %121 : vector<8x32xf32>
    %c6_i32 = arith.constant 6 : i32
    %123 = arith.index_cast %c6_i32 : i32 to index
    %c0_26 = arith.constant 0 : index
    %c0_27 = arith.constant 0 : index
    %124 = vector.load %arg1[%123, %c0_26, %c0_27] : memref<8x8x128xf32, #tpu.memory_space<vmem>>, vector<1x8x128xf32>
    %125 = vector.shape_cast %124 : vector<1x8x128xf32> to vector<8x128xf32>
    %cst_28 = arith.constant dense<0.000000e+00> : vector<8x128xf32>
    %126 = tpu.matmul %122, %0, %cst_28 {dimension_numbers = #tpu.dot_dimension_numbers<[1], [0], [0], [1], [0, 0, 1, 1], [], []>} : vector<8x32xf32>, vector<32x128xf32>, vector<8x128xf32> -> vector<8x128xf32>
    %127 = arith.addf %125, %126 : vector<8x128xf32>
    %128 = arith.negf %127 : vector<8x128xf32>
    %129 = math.exp %128 : vector<8x128xf32>
    %cst_29 = arith.constant 1.000000e+00 : f32
    %130 = vector.broadcast %cst_29 : f32 to vector<8x128xf32>
    %131 = arith.addf %130, %129 : vector<8x128xf32>
    %132 = arith.divf %130, %131 : vector<8x128xf32>
    %133 = vector.extract_strided_slice %132 {offsets = [0, 0], sizes = [8, 32], strides = [1, 1]} : vector<8x128xf32> to vector<8x32xf32>
    %134 = vector.extract_strided_slice %132 {offsets = [0, 32], sizes = [8, 32], strides = [1, 1]} : vector<8x128xf32> to vector<8x32xf32>
    %135 = vector.extract_strided_slice %132 {offsets = [0, 64], sizes = [8, 32], strides = [1, 1]} : vector<8x128xf32> to vector<8x32xf32>
    %136 = vector.extract_strided_slice %127 {offsets = [0, 96], sizes = [8, 32], strides = [1, 1]} : vector<8x128xf32> to vector<8x32xf32>
    %137 = math.tanh %136 : vector<8x32xf32>
    %138 = arith.mulf %134, %120 : vector<8x32xf32>
    %139 = arith.mulf %133, %137 : vector<8x32xf32>
    %140 = arith.addf %138, %139 : vector<8x32xf32>
    %141 = math.tanh %140 : vector<8x32xf32>
    %142 = arith.mulf %135, %141 : vector<8x32xf32>
    %c7_i32 = arith.constant 7 : i32
    %143 = arith.index_cast %c7_i32 : i32 to index
    %c0_30 = arith.constant 0 : index
    %c0_31 = arith.constant 0 : index
    %144 = vector.load %arg1[%143, %c0_30, %c0_31] : memref<8x8x128xf32, #tpu.memory_space<vmem>>, vector<1x8x128xf32>
    %145 = vector.shape_cast %144 : vector<1x8x128xf32> to vector<8x128xf32>
    %cst_32 = arith.constant dense<0.000000e+00> : vector<8x128xf32>
    %146 = tpu.matmul %142, %0, %cst_32 {dimension_numbers = #tpu.dot_dimension_numbers<[1], [0], [0], [1], [0, 0, 1, 1], [], []>} : vector<8x32xf32>, vector<32x128xf32>, vector<8x128xf32> -> vector<8x128xf32>
    %147 = arith.addf %145, %146 : vector<8x128xf32>
    %148 = arith.negf %147 : vector<8x128xf32>
    %149 = math.exp %148 : vector<8x128xf32>
    %cst_33 = arith.constant 1.000000e+00 : f32
    %150 = vector.broadcast %cst_33 : f32 to vector<8x128xf32>
    %151 = arith.addf %150, %149 : vector<8x128xf32>
    %152 = arith.divf %150, %151 : vector<8x128xf32>
    %153 = vector.extract_strided_slice %152 {offsets = [0, 0], sizes = [8, 32], strides = [1, 1]} : vector<8x128xf32> to vector<8x32xf32>
    %154 = vector.extract_strided_slice %152 {offsets = [0, 32], sizes = [8, 32], strides = [1, 1]} : vector<8x128xf32> to vector<8x32xf32>
    %155 = vector.extract_strided_slice %152 {offsets = [0, 64], sizes = [8, 32], strides = [1, 1]} : vector<8x128xf32> to vector<8x32xf32>
    %156 = vector.extract_strided_slice %147 {offsets = [0, 96], sizes = [8, 32], strides = [1, 1]} : vector<8x128xf32> to vector<8x32xf32>
    %157 = math.tanh %156 : vector<8x32xf32>
    %158 = arith.mulf %154, %140 : vector<8x32xf32>
    %159 = arith.mulf %153, %157 : vector<8x32xf32>
    %160 = arith.addf %158, %159 : vector<8x32xf32>
    %161 = math.tanh %160 : vector<8x32xf32>
    %162 = arith.mulf %155, %161 : vector<8x32xf32>
    %c8_i32 = arith.constant 8 : i32
    %c0_34 = arith.constant 0 : index
    %c0_35 = arith.constant 0 : index
    %163 = vector.load %arg3[%c0_34, %c0_35] : memref<1x32xf32, #tpu.memory_space<vmem>>, vector<1x32xf32>
    %164 = vector.broadcast %163 : vector<1x32xf32> to vector<8x32xf32>
    %165 = arith.mulf %162, %164 : vector<8x32xf32>
    %cst_36 = arith.constant dense<0.000000e+00> : vector<8xf32>
    %166 = vector.multi_reduction <add>, %165, %cst_36 [1] : vector<8x32xf32> to vector<8xf32>
    %167 = vector.shape_cast %166 : vector<8xf32> to vector<8x1xf32>
    %c0_37 = arith.constant 0 : index
    %c0_38 = arith.constant 0 : index
    %168 = memref.load %arg4[%c0_37, %c0_38] : memref<1x1xf32, #tpu.memory_space<smem>>
    %169 = vector.broadcast %168 : f32 to vector<8x1xf32>
    %170 = arith.addf %167, %169 : vector<8x1xf32>
    %c0_39 = arith.constant 0 : index
    %c0_40 = arith.constant 0 : index
    %171 = vector.load %arg5[%c0_39, %c0_40] : memref<8x1xf32, #tpu.memory_space<vmem>>, vector<8x1xf32>
    tpu.vector_store %arg5[%c0_39, %c0_40], %170 {strides = array<i32>} : memref<8x1xf32, #tpu.memory_space<vmem>>, vector<8x1xf32>,
    return
  }
  func.func @transform_0(%arg0: i32) -> (i32, i32, i32) {
    %c0_i32 = arith.constant 0 : i32
    %c0_i32_0 = arith.constant 0 : i32
    %c0_i32_1 = arith.constant 0 : i32
    return %c0_i32, %arg0, %c0_i32_0 : i32, i32, i32
  }
  func.func @transform_1(%arg0: i32) -> (i32, i32) {
    %c0_i32 = arith.constant 0 : i32
    %c0_i32_0 = arith.constant 0 : i32
    %c0_i32_1 = arith.constant 0 : i32
    return %c0_i32, %c0_i32_0 : i32, i32
  }
  func.func @transform_2(%arg0: i32) -> (i32, i32) {
    %c0_i32 = arith.constant 0 : i32
    %c0_i32_0 = arith.constant 0 : i32
    %c0_i32_1 = arith.constant 0 : i32
    return %c0_i32, %c0_i32_0 : i32, i32
  }
  func.func @transform_3(%arg0: i32) -> (i32, i32) {
    %c0_i32 = arith.constant 0 : i32
    %c0_i32_0 = arith.constant 0 : i32
    %c0_i32_1 = arith.constant 0 : i32
    return %c0_i32, %c0_i32_0 : i32, i32
  }
  func.func @transform_4(%arg0: i32) -> (i32, i32) {
    %c0_i32 = arith.constant 0 : i32
    %c0_i32_0 = arith.constant 0 : i32
    return %arg0, %c0_i32 : i32, i32
  }
}

</mosaic_0001>

<llo_original>
// kernel: tpu_custom_call.1
$region0: #{tpu_custom_call.1}
  #allocation0 [shape = 'u32[]', space=smem, size = 0x4, offset = 0x4, fixed_abs, tag = 'smem constant byte address 0x4 - core index']
  #allocation1 [shape = 'u32[144,128]{1,0:T(1,128)}', space=vmem, size = 0x12000, scoped, tag = 'internal scratch']
  #allocation2 [shape = 'f32[1,1]{1,0:T(1,128)S(6)}', space=smem, size = 0x200, scoped, tag = 'scoped memory for tpu_custom_call.1']
  %s0 = inlined_call_operand.hbm [shape: f32[8,8,128], index: 0, kind: input, shape index: {}]
  %s1 = inlined_call_operand.hbm [shape: f32[32,128], index: 1, kind: input, shape index: {}]
  %s2 = inlined_call_operand.vmem [shape: f32[1,32], index: 2, kind: input, shape index: {}]
  %s3 = inlined_call_operand.<no memory space> [shape: f32[1,1], index: 3, kind: input, shape index: {}]
  %s4 = inlined_call_operand.vmem [shape: f32[8,1], index: 4, kind: output, shape index: {}]
  %s5 = sld [smem:[#allocation0]]
  $region34: #{tpu_custom_call.1} parent=0
    _
  %s7 = ssub.s32 1, %s5
  %s8 = scalar_select 0, %s7, %s5
  %9 = sst [smem:[#allocation2]] %s3
  $region1: #{tpu_custom_call.1} parent=0
    #allocation3 [shape = 'u8[32768]{0}', space=vmem, size = 0x8000, scoped, tag = 'input window, operand 0, single buffered']
    #allocation4 [shape = 's32[1]{0}', space=sflag, size = 0x4, scoped, tag = 'scoped memory for tpu_custom_call.1']
    #allocation5 [shape = 'u8[16384]{0}', space=vmem, size = 0x4000, scoped, tag = 'input window, operand 1, single buffered']
    #allocation6 [shape = 's32[1]{0}', space=sflag, size = 0x4, scoped, tag = 'scoped memory for tpu_custom_call.1']
    %10 = vsyncpa [#allocation4], 0
    %11 = vsyncpa [#allocation6], 0
    // Predicated region
    $region2: #{tpu_custom_call.1} parent=1 // pred_check
      _
    $region3: #{tpu_custom_call.1} parent=1 // pred_check_branch
      %13 = sbr.rel (0) target = $region5
    $region4: #{tpu_custom_call.1} parent=1 // pred_region
      %s15 = ssub.s32 1024, 1024
      %16 = vsyncadd [#allocation4], %s15
      %s17 = sshll.u32 [#allocation3], 4
      %s18 = int_to_ptr.vmem [resolvable:$true] %s17
      %23 = dma.hbm_to_vmem [thread:$0]  %s0, 1024, %s18, [#allocation4], 128, 128, 8
    $region5: #{tpu_custom_call.1} parent=1 // pred_fallthru
      _
    // Predicated region
    $region6: #{tpu_custom_call.1} parent=1 // pred_check
      _
    $region7: #{tpu_custom_call.1} parent=1 // pred_check_branch
      %25 = sbr.rel (0) target = $region9
    $region8: #{tpu_custom_call.1} parent=1 // pred_region
      %s27 = ssub.s32 512, 512
      %28 = vsyncadd [#allocation6], %s27
      %s29 = sshll.u32 [#allocation5], 4
      %s30 = int_to_ptr.vmem [resolvable:$true] %s29
      %35 = dma.hbm_to_vmem [thread:$0]  %s1, 512, %s30, [#allocation6], 128, 128, 8
    $region9: #{tpu_custom_call.1} parent=1 // pred_fallthru
      _
    // Predicated region
    $region10: #{tpu_custom_call.1} parent=1 // pred_check
      _
    $region11: #{tpu_custom_call.1} parent=1 // pred_check_branch
      %37 = sbr.rel (0) target = $region13
    $region12: #{tpu_custom_call.1} parent=1 // pred_region
      _
    $region13: #{tpu_custom_call.1} parent=1 // pred_fallthru
      _
    // Predicated region
    $region14: #{tpu_custom_call.1} parent=1 // pred_check
      _
    $region15: #{tpu_custom_call.1} parent=1 // pred_check_branch
      %39 = sbr.rel (0) target = $region17
    $region16: #{tpu_custom_call.1} parent=1 // pred_region
      _
    $region17: #{tpu_custom_call.1} parent=1 // pred_fallthru
      _
    // Predicated region
    $region18: #{tpu_custom_call.1} parent=1 // pred_check
      _
    $region19: #{tpu_custom_call.1} parent=1 // pred_check_branch
      %41 = sbr.rel (0) target = $region21
    $region20: #{tpu_custom_call.1} parent=1 // pred_region
      %42 = dma.done [#allocation4], 1024
    $region21: #{tpu_custom_call.1} parent=1 // pred_fallthru
      _
    // Predicated region
    $region22: #{tpu_custom_call.1} parent=1 // pred_check
      _
    $region23: #{tpu_custom_call.1} parent=1 // pred_check_branch
      %44 = sbr.rel (0) target = $region25
    $region24: #{tpu_custom_call.1} parent=1 // pred_region
      %45 = dma.done [#allocation6], 512
    $region25: #{tpu_custom_call.1} parent=1 // pred_fallthru
      _
    %v46 = vld [vmem:[#allocation5] sm:$0xff]
    %v47 = vld [vmem:[#allocation5 + $0x8] sm:$0xff]
    %v48 = vld [vmem:[#allocation5 + $0x10] sm:$0xff]
    %v49 = vld [vmem:[#allocation5 + $0x18] sm:$0xff]
    %v50 = vld [vmem:[#allocation3] sm:$0xff]
    %vm51 = vcmask 261120
    %v53 = vsel %vm51, 0.0, 0
    %55 = vmatprep.subr.mxu0 0.0
    %56 = vmatpush1.msra.mxu0 0.0
    %57 = vmatprep.subr.mxu0 0.0
    %58 = vmatpush1.msra.mxu0 0.0
    %59 = vmatprep.subr.mxu0 0.0
    %60 = vmatpush1.msra.mxu0 0.0
    %61 = vmatprep.subr.mxu0 0.0
    %62 = vmatpush1.msra.mxu0 0.0
    %63 = vmatprep.subr.mxu0 0.0
    %64 = vmatpush1.msra.mxu0 0.0
    %65 = vmatprep.subr.mxu0 0.0
    %66 = vmatpush1.msra.mxu0 0.0
    %67 = vmatprep.subr.mxu0 0.0
    %68 = vmatpush1.msra.mxu0 0.0
    %69 = vmatprep.subr.mxu0 0.0
    %70 = vmatpush1.msra.mxu0 0.0
    %71 = vmatprep.subr.mxu0 0.0
    %72 = vmatpush1.msra.mxu0 0.0
    %73 = vmatprep.subr.mxu0 0.0
    %74 = vmatpush1.msra.mxu0 0.0
    %75 = vmatprep.subr.mxu0 0.0
    %76 = vmatpush1.msra.mxu0 0.0
    %77 = vmatprep.subr.mxu0 0.0
    %78 = vmatpush1.msra.mxu0 0.0
    %79 = vmatprep.subr.mxu0 0.0
    %80 = vmatpush1.msra.mxu0 %v49
    %81 = vmatprep.subr.mxu0 0.0
    %82 = vmatpush1.msra.mxu0 %v48
    %83 = vmatprep.subr.mxu0 0.0
    %84 = vmatpush1.msra.mxu0 %v47
    %85 = vmatprep.subr.mxu0 0.0
    %86 = vmatpush1.msra.mxu0 %v46
    %87 = vmatprep.subr.mxu0 0.0
    %88 = vmatpush2.msra.mxu0 0.0
    %89 = vmatprep.subr.mxu0 0.0
    %90 = vmatpush2.msra.mxu0 0.0
    %91 = vmatprep.subr.mxu0 0.0
    %92 = vmatpush2.msra.mxu0 0.0
    %93 = vmatprep.subr.mxu0 0.0
    %94 = vmatpush2.msra.mxu0 0.0
    %95 = vmatprep.subr.mxu0 0.0
    %96 = vmatpush2.msra.mxu0 0.0
    %97 = vmatprep.subr.mxu0 0.0
    %98 = vmatpush2.msra.mxu0 0.0
    %99 = vmatprep.subr.mxu0 0.0
    %100 = vmatpush2.msra.mxu0 0.0
    %101 = vmatprep.subr.mxu0 0.0
    %102 = vmatpush2.msra.mxu0 0.0
    %103 = vmatprep.subr.mxu0 0.0
    %104 = vmatpush2.msra.mxu0 0.0
    %105 = vmatprep.subr.mxu0 0.0
    %106 = vmatpush2.msra.mxu0 0.0
    %107 = vmatprep.subr.mxu0 0.0
    %108 = vmatpush2.msra.mxu0 0.0
    %109 = vmatprep.subr.mxu0 0.0
    %110 = vmatpush2.msra.mxu0 0.0
    %111 = vmatprep.subr.mxu0 0.0
    %112 = vmatpush2.msra.mxu0 0.0
    %113 = vmatprep.subr.mxu0 0.0
    %114 = vmatpush2.msra.mxu0 0.0
    %115 = vmatprep.subr.mxu0 0.0
    %116 = vmatpush2.msra.mxu0 0.0
    %117 = vmatprep.subr.mxu0 0.0
    %118 = vmatpush2.msra.mxu0 0.0
    %119 = vmatprep.mubr.f32.mxu0 0.0
    %120 = vmatmul.mubr.f32.gmra.mxu0 %v53
    %v121 = vpop.f32.mrf.mxu0
    %v122 = vadd.f32 0.0, %v121
    %v123 = vpop.f32.mrf.mxu0
    %124 = vdwg.mxu0
    %v125 = vadd.f32 %v50, %v122
    %v126 = vxor.u32 %v125, 2147483648
    %v127 = vmul.f32 %v126, 1.442695
    %v128 = vpow.pop %v127
    %v129 = vadd.f32 %v128, 1.0
    %v130 = vrcp.pop %v129
    %v131 = vmul.f32 1.0, %v130
    %v132 = vtanh.pop %v125
    %v133 = vmul.f32 %v131, 0.0
    %135 = vrot.lane.b32.xlu0 %v132, 32
    %v136 = vpop.permute.xlu0 %135
    %v138 = vmul.f32 %v131, %v136
    %140 = vrot.lane.b32.xlu0 %v138, 32
    %v141 = vpop.permute.xlu0 %140
    %v143 = vadd.f32 %v133, %v141
    %v144 = vtanh.pop %v143
    %146 = vrot.lane.b32.xlu0 %v144, 32
    %v147 = vpop.permute.xlu0 %146
    %v149 = vmul.f32 %v131, %v147
    %s150 = scalar_lea.vmem [#allocation3], 8
    %v151 = vld [vmem:[%s150] sm:$0xff]
    %153 = vrot.lane.b32.xlu0 %v149, 64
    %v154 = vpop.permute.xlu0 %153
    %v155 = vsel %vm51, %v154, 0
    %157 = vmatprep.subr.mxu0 0.0
    %158 = vmatpush1.msra.mxu0 0.0
    %159 = vmatprep.subr.mxu0 0.0
    %160 = vmatpush1.msra.mxu0 0.0
    %161 = vmatprep.subr.mxu0 0.0
    %162 = vmatpush1.msra.mxu0 0.0
    %163 = vmatprep.subr.mxu0 0.0
    %164 = vmatpush1.msra.mxu0 0.0
    %165 = vmatprep.subr.mxu0 0.0
    %166 = vmatpush1.msra.mxu0 0.0
    %167 = vmatprep.subr.mxu0 0.0
    %168 = vmatpush1.msra.mxu0 0.0
    %169 = vmatprep.subr.mxu0 0.0
    %170 = vmatpush1.msra.mxu0 0.0
    %171 = vmatprep.subr.mxu0 0.0
    %172 = vmatpush1.msra.mxu0 0.0
    %173 = vmatprep.subr.mxu0 0.0
    %174 = vmatpush1.msra.mxu0 0.0
    %175 = vmatprep.subr.mxu0 0.0
    %176 = vmatpush1.msra.mxu0 0.0
    %177 = vmatprep.subr.mxu0 0.0
    %178 = vmatpush1.msra.mxu0 0.0
    %179 = vmatprep.subr.mxu0 0.0
    %180 = vmatpush1.msra.mxu0 0.0
    %181 = vmatprep.subr.mxu0 0.0
    %182 = vmatpush1.msra.mxu0 %v49
    %183 = vmatprep.subr.mxu0 0.0
    %184 = vmatpush1.msra.mxu0 %v48
    %185 = vmatprep.subr.mxu0 0.0
    %186 = vmatpush1.msra.mxu0 %v47
    %187 = vmatprep.subr.mxu0 0.0
    %188 = vmatpush1.msra.mxu0 %v46
    %189 = vmatprep.subr.mxu0 0.0
    %190 = vmatpush2.msra.mxu0 0.0
    %191 = vmatprep.subr.mxu0 0.0
    %192 = vmatpush2.msra.mxu0 0.0
    %193 = vmatprep.subr.mxu0 0.0
    %194 = vmatpush2.msra.mxu0 0.0
    %195 = vmatprep.subr.mxu0 0.0
    %196 = vmatpush2.msra.mxu0 0.0
    %197 = vmatprep.subr.mxu0 0.0
    %198 = vmatpush2.msra.mxu0 0.0
    %199 = vmatprep.subr.mxu0 0.0
    %200 = vmatpush2.msra.mxu0 0.0
    %201 = vmatprep.subr.mxu0 0.0
    %202 = vmatpush2.msra.mxu0 0.0
    %203 = vmatprep.subr.mxu0 0.0
    %204 = vmatpush2.msra.mxu0 0.0
    %205 = vmatprep.subr.mxu0 0.0
    %206 = vmatpush2.msra.mxu0 0.0
    %207 = vmatprep.subr.mxu0 0.0
    %208 = vmatpush2.msra.mxu0 0.0
    %209 = vmatprep.subr.mxu0 0.0
    %210 = vmatpush2.msra.mxu0 0.0
    %211 = vmatprep.subr.mxu0 0.0
    %212 = vmatpush2.msra.mxu0 0.0
    %213 = vmatprep.subr.mxu0 0.0
    %214 = vmatpush2.msra.mxu0 0.0
    %215 = vmatprep.subr.mxu0 0.0
    %216 = vmatpush2.msra.mxu0 0.0
    %217 = vmatprep.subr.mxu0 0.0
    %218 = vmatpush2.msra.mxu0 0.0
    %219 = vmatprep.subr.mxu0 0.0
    %220 = vmatpush2.msra.mxu0 0.0
    %221 = vmatprep.mubr.f32.mxu0 0.0
    %222 = vmatmul.mubr.f32.gmra.mxu0 %v155
    %v223 = vpop.f32.mrf.mxu0
    %v224 = vadd.f32 0.0, %v223
    %v225 = vpop.f32.mrf.mxu0
    %226 = vdwg.mxu0
    %v227 = vadd.f32 %v151, %v224
    %v228 = vxor.u32 %v227, 2147483648
    %v229 = vmul.f32 %v228, 1.442695
    %v230 = vpow.pop %v229
    %v231 = vadd.f32 %v230, 1.0
    %v232 = vrcp.pop %v231
    %v233 = vmul.f32 1.0, %v232
    %v234 = vtanh.pop %v227
    %v235 = vmul.f32 %v233, %v143
    %237 = vrot.lane.b32.xlu0 %v234, 32
    %v238 = vpop.permute.xlu0 %237
    %v240 = vmul.f32 %v233, %v238
    %242 = vrot.lane.b32.xlu0 %v240, 32
    %v243 = vpop.permute.xlu0 %242
    %v245 = vadd.f32 %v235, %v243
    %v246 = vtanh.pop %v245
    %248 = vrot.lane.b32.xlu0 %v246, 32
    %v249 = vpop.permute.xlu0 %248
    %v251 = vmul.f32 %v233, %v249
    %s252 = scalar_lea.vmem [#allocation3], 16
    %v253 = vld [vmem:[%s252] sm:$0xff]
    %255 = vrot.lane.b32.xlu0 %v251, 64
    %v256 = vpop.permute.xlu0 %255
    %v257 = vsel %vm51, %v256, 0
    %259 = vmatprep.subr.mxu0 0.0
    %260 = vmatpush1.msra.mxu0 0.0
    %261 = vmatprep.subr.mxu0 0.0
    %262 = vmatpush1.msra.mxu0 0.0
    %263 = vmatprep.subr.mxu0 0.0
    %264 = vmatpush1.msra.mxu0 0.0
    %265 = vmatprep.subr.mxu0 0.0
    %266 = vmatpush1.msra.mxu0 0.0
    %267 = vmatprep.subr.mxu0 0.0
    %268 = vmatpush1.msra.mxu0 0.0
    %269 = vmatprep.subr.mxu0 0.0
    %270 = vmatpush1.msra.mxu0 0.0
    %271 = vmatprep.subr.mxu0 0.0
    %272 = vmatpush1.msra.mxu0 0.0
    %273 = vmatprep.subr.mxu0 0.0
    %274 = vmatpush1.msra.mxu0 0.0
    %275 = vmatprep.subr.mxu0 0.0
    %276 = vmatpush1.msra.mxu0 0.0
    %277 = vmatprep.subr.mxu0 0.0
    %278 = vmatpush1.msra.mxu0 0.0
    %279 = vmatprep.subr.mxu0 0.0
    %280 = vmatpush1.msra.mxu0 0.0
    %281 = vmatprep.subr.mxu0 0.0
    %282 = vmatpush1.msra.mxu0 0.0
    %283 = vmatprep.subr.mxu0 0.0
    %284 = vmatpush1.msra.mxu0 %v49
    %285 = vmatprep.subr.mxu0 0.0
    %286 = vmatpush1.msra.mxu0 %v48
    %287 = vmatprep.subr.mxu0 0.0
    %288 = vmatpush1.msra.mxu0 %v47
    %289 = vmatprep.subr.mxu0 0.0
    %290 = vmatpush1.msra.mxu0 %v46
    %291 = vmatprep.subr.mxu0 0.0
    %292 = vmatpush2.msra.mxu0 0.0
    %293 = vmatprep.subr.mxu0 0.0
    %294 = vmatpush2.msra.mxu0 0.0
    %295 = vmatprep.subr.mxu0 0.0
    %296 = vmatpush2.msra.mxu0 0.0
    %297 = vmatprep.subr.mxu0 0.0
    %298 = vmatpush2.msra.mxu0 0.0
    %299 = vmatprep.subr.mxu0 0.0
    %300 = vmatpush2.msra.mxu0 0.0
    %301 = vmatprep.subr.mxu0 0.0
    %302 = vmatpush2.msra.mxu0 0.0
    %303 = vmatprep.subr.mxu0 0.0
    %304 = vmatpush2.msra.mxu0 0.0
    %305 = vmatprep.subr.mxu0 0.0
    %306 = vmatpush2.msra.mxu0 0.0
    %307 = vmatprep.subr.mxu0 0.0
    %308 = vmatpush2.msra.mxu0 0.0
    %309 = vmatprep.subr.mxu0 0.0
    %310 = vmatpush2.msra.mxu0 0.0
    %311 = vmatprep.subr.mxu0 0.0
    %312 = vmatpush2.msra.mxu0 0.0
    %313 = vmatprep.subr.mxu0 0.0
    %314 = vmatpush2.msra.mxu0 0.0
    %315 = vmatprep.subr.mxu0 0.0
    %316 = vmatpush2.msra.mxu0 0.0
    %317 = vmatprep.subr.mxu0 0.0
    %318 = vmatpush2.msra.mxu0 0.0
    %319 = vmatprep.subr.mxu0 0.0
    %320 = vmatpush2.msra.mxu0 0.0
    %321 = vmatprep.subr.mxu0 0.0
    %322 = vmatpush2.msra.mxu0 0.0
    %323 = vmatprep.mubr.f32.mxu0 0.0
    %324 = vmatmul.mubr.f32.gmra.mxu0 %v257
    %v325 = vpop.f32.mrf.mxu0
    %v326 = vadd.f32 0.0, %v325
    %v327 = vpop.f32.mrf.mxu0
    %328 = vdwg.mxu0
    %v329 = vadd.f32 %v253, %v326
    %v330 = vxor.u32 %v329, 2147483648
    %v331 = vmul.f32 %v330, 1.442695
    %v332 = vpow.pop %v331
    %v333 = vadd.f32 %v332, 1.0
    %v334 = vrcp.pop %v333
    %v335 = vmul.f32 1.0, %v334
    %v336 = vtanh.pop %v329
    %v337 = vmul.f32 %v335, %v245
    %339 = vrot.lane.b32.xlu0 %v336, 32
    %v340 = vpop.permute.xlu0 %339
    %v342 = vmul.f32 %v335, %v340
    %344 = vrot.lane.b32.xlu0 %v342, 32
    %v345 = vpop.permute.xlu0 %344
    %v347 = vadd.f32 %v337, %v345
    %v348 = vtanh.pop %v347
    %350 = vrot.lane.b32.xlu0 %v348, 32
    %v351 = vpop.permute.xlu0 %350
    %v353 = vmul.f32 %v335, %v351
    %s354 = scalar_lea.vmem [#allocation3], 24
    %v355 = vld [vmem:[%s354] sm:$0xff]
    %357 = vrot.lane.b32.xlu0 %v353, 64
    %v358 = vpop.permute.xlu0 %357
    %v359 = vsel %vm51, %v358, 0
    %361 = vmatprep.subr.mxu0 0.0
    %362 = vmatpush1.msra.mxu0 0.0
    %363 = vmatprep.subr.mxu0 0.0
    %364 = vmatpush1.msra.mxu0 0.0
    %365 = vmatprep.subr.mxu0 0.0
    %366 = vmatpush1.msra.mxu0 0.0
    %367 = vmatprep.subr.mxu0 0.0
    %368 = vmatpush1.msra.mxu0 0.0
    %369 = vmatprep.subr.mxu0 0.0
    %370 = vmatpush1.msra.mxu0 0.0
    %371 = vmatprep.subr.mxu0 0.0
    %372 = vmatpush1.msra.mxu0 0.0
    %373 = vmatprep.subr.mxu0 0.0
    %374 = vmatpush1.msra.mxu0 0.0
    %375 = vmatprep.subr.mxu0 0.0
    %376 = vmatpush1.msra.mxu0 0.0
    %377 = vmatprep.subr.mxu0 0.0
    %378 = vmatpush1.msra.mxu0 0.0
    %379 = vmatprep.subr.mxu0 0.0
    %380 = vmatpush1.msra.mxu0 0.0
    %381 = vmatprep.subr.mxu0 0.0
    %382 = vmatpush1.msra.mxu0 0.0
    %383 = vmatprep.subr.mxu0 0.0
    %384 = vmatpush1.msra.mxu0 0.0
    %385 = vmatprep.subr.mxu0 0.0
    %386 = vmatpush1.msra.mxu0 %v49
    %387 = vmatprep.subr.mxu0 0.0
    %388 = vmatpush1.msra.mxu0 %v48
    %389 = vmatprep.subr.mxu0 0.0
    %390 = vmatpush1.msra.mxu0 %v47
    %391 = vmatprep.subr.mxu0 0.0
    %392 = vmatpush1.msra.mxu0 %v46
    %393 = vmatprep.subr.mxu0 0.0
    %394 = vmatpush2.msra.mxu0 0.0
    %395 = vmatprep.subr.mxu0 0.0
    %396 = vmatpush2.msra.mxu0 0.0
    %397 = vmatprep.subr.mxu0 0.0
    %398 = vmatpush2.msra.mxu0 0.0
    %399 = vmatprep.subr.mxu0 0.0
    %400 = vmatpush2.msra.mxu0 0.0
    %401 = vmatprep.subr.mxu0 0.0
    %402 = vmatpush2.msra.mxu0 0.0
    %403 = vmatprep.subr.mxu0 0.0
    %404 = vmatpush2.msra.mxu0 0.0
    %405 = vmatprep.subr.mxu0 0.0
    %406 = vmatpush2.msra.mxu0 0.0
    %407 = vmatprep.subr.mxu0 0.0
    %408 = vmatpush2.msra.mxu0 0.0
    %409 = vmatprep.subr.mxu0 0.0
    %410 = vmatpush2.msra.mxu0 0.0
    %411 = vmatprep.subr.mxu0 0.0
    %412 = vmatpush2.msra.mxu0 0.0
    %413 = vmatprep.subr.mxu0 0.0
    %414 = vmatpush2.msra.mxu0 0.0
    %415 = vmatprep.subr.mxu0 0.0
    %416 = vmatpush2.msra.mxu0 0.0
    %417 = vmatprep.subr.mxu0 0.0
    %418 = vmatpush2.msra.mxu0 0.0
    %419 = vmatprep.subr.mxu0 0.0
    %420 = vmatpush2.msra.mxu0 0.0
    %421 = vmatprep.subr.mxu0 0.0
    %422 = vmatpush2.msra.mxu0 0.0
    %423 = vmatprep.subr.mxu0 0.0
    %424 = vmatpush2.msra.mxu0 0.0
    %425 = vmatprep.mubr.f32.mxu0 0.0
    %426 = vmatmul.mubr.f32.gmra.mxu0 %v359
    %v427 = vpop.f32.mrf.mxu0
    %v428 = vadd.f32 0.0, %v427
    %v429 = vpop.f32.mrf.mxu0
    %430 = vdwg.mxu0
    %v431 = vadd.f32 %v355, %v428
    %v432 = vxor.u32 %v431, 2147483648
    %v433 = vmul.f32 %v432, 1.442695
    %v434 = vpow.pop %v433
    %v435 = vadd.f32 %v434, 1.0
    %v436 = vrcp.pop %v435
    %v437 = vmul.f32 1.0, %v436
    %v438 = vtanh.pop %v431
    %v439 = vmul.f32 %v437, %v347
    %441 = vrot.lane.b32.xlu0 %v438, 32
    %v442 = vpop.permute.xlu0 %441
    %v444 = vmul.f32 %v437, %v442
    %446 = vrot.lane.b32.xlu0 %v444, 32
    %v447 = vpop.permute.xlu0 %446
    %v449 = vadd.f32 %v439, %v447
    %v450 = vtanh.pop %v449
    %452 = vrot.lane.b32.xlu0 %v450, 32
    %v453 = vpop.permute.xlu0 %452
    %v455 = vmul.f32 %v437, %v453
    %s456 = scalar_lea.vmem [#allocation3], 32
    %v457 = vld [vmem:[%s456] sm:$0xff]
    %459 = vrot.lane.b32.xlu0 %v455, 64
    %v460 = vpop.permute.xlu0 %459
    %v461 = vsel %vm51, %v460, 0
    %463 = vmatprep.subr.mxu0 0.0
    %464 = vmatpush1.msra.mxu0 0.0
    %465 = vmatprep.subr.mxu0 0.0
    %466 = vmatpush1.msra.mxu0 0.0
    %467 = vmatprep.subr.mxu0 0.0
    %468 = vmatpush1.msra.mxu0 0.0
    %469 = vmatprep.subr.mxu0 0.0
    %470 = vmatpush1.msra.mxu0 0.0
    %471 = vmatprep.subr.mxu0 0.0
    %472 = vmatpush1.msra.mxu0 0.0
    %473 = vmatprep.subr.mxu0 0.0
    %474 = vmatpush1.msra.mxu0 0.0
    %475 = vmatprep.subr.mxu0 0.0
    %476 = vmatpush1.msra.mxu0 0.0
    %477 = vmatprep.subr.mxu0 0.0
    %478 = vmatpush1.msra.mxu0 0.0
    %479 = vmatprep.subr.mxu0 0.0
    %480 = vmatpush1.msra.mxu0 0.0
    %481 = vmatprep.subr.mxu0 0.0
    %482 = vmatpush1.msra.mxu0 0.0
    %483 = vmatprep.subr.mxu0 0.0
    %484 = vmatpush1.msra.mxu0 0.0
    %485 = vmatprep.subr.mxu0 0.0
    %486 = vmatpush1.msra.mxu0 0.0
    %487 = vmatprep.subr.mxu0 0.0
    %488 = vmatpush1.msra.mxu0 %v49
    %489 = vmatprep.subr.mxu0 0.0
    %490 = vmatpush1.msra.mxu0 %v48
    %491 = vmatprep.subr.mxu0 0.0
    %492 = vmatpush1.msra.mxu0 %v47
    %493 = vmatprep.subr.mxu0 0.0
    %494 = vmatpush1.msra.mxu0 %v46
    %495 = vmatprep.subr.mxu0 0.0
    %496 = vmatpush2.msra.mxu0 0.0
    %497 = vmatprep.subr.mxu0 0.0
    %498 = vmatpush2.msra.mxu0 0.0
    %499 = vmatprep.subr.mxu0 0.0
    %500 = vmatpush2.msra.mxu0 0.0
    %501 = vmatprep.subr.mxu0 0.0
    %502 = vmatpush2.msra.mxu0 0.0
    %503 = vmatprep.subr.mxu0 0.0
    %504 = vmatpush2.msra.mxu0 0.0
    %505 = vmatprep.subr.mxu0 0.0
    %506 = vmatpush2.msra.mxu0 0.0
    %507 = vmatprep.subr.mxu0 0.0
    %508 = vmatpush2.msra.mxu0 0.0
    %509 = vmatprep.subr.mxu0 0.0
    %510 = vmatpush2.msra.mxu0 0.0
    %511 = vmatprep.subr.mxu0 0.0
    %512 = vmatpush2.msra.mxu0 0.0
    %513 = vmatprep.subr.mxu0 0.0
    %514 = vmatpush2.msra.mxu0 0.0
    %515 = vmatprep.subr.mxu0 0.0
    %516 = vmatpush2.msra.mxu0 0.0
    %517 = vmatprep.subr.mxu0 0.0
    %518 = vmatpush2.msra.mxu0 0.0
    %519 = vmatprep.subr.mxu0 0.0
    %520 = vmatpush2.msra.mxu0 0.0
    %521 = vmatprep.subr.mxu0 0.0
    %522 = vmatpush2.msra.mxu0 0.0
    %523 = vmatprep.subr.mxu0 0.0
    %524 = vmatpush2.msra.mxu0 0.0
    %525 = vmatprep.subr.mxu0 0.0
    %526 = vmatpush2.msra.mxu0 0.0
    %527 = vmatprep.mubr.f32.mxu0 0.0
    %528 = vmatmul.mubr.f32.gmra.mxu0 %v461
    %v529 = vpop.f32.mrf.mxu0
    %v530 = vadd.f32 0.0, %v529
    %v531 = vpop.f32.mrf.mxu0
    %532 = vdwg.mxu0
    %v533 = vadd.f32 %v457, %v530
    %v534 = vxor.u32 %v533, 2147483648
    %v535 = vmul.f32 %v534, 1.442695
    %v536 = vpow.pop %v535
    %v537 = vadd.f32 %v536, 1.0
    %v538 = vrcp.pop %v537
    %v539 = vmul.f32 1.0, %v538
    %v540 = vtanh.pop %v533
    %v541 = vmul.f32 %v539, %v449
    %543 = vrot.lane.b32.xlu0 %v540, 32
    %v544 = vpop.permute.xlu0 %543
    %v546 = vmul.f32 %v539, %v544
    %548 = vrot.lane.b32.xlu0 %v546, 32
    %v549 = vpop.permute.xlu0 %548
    %v551 = vadd.f32 %v541, %v549
    %v552 = vtanh.pop %v551
    %554 = vrot.lane.b32.xlu0 %v552, 32
    %v555 = vpop.permute.xlu0 %554
    %v557 = vmul.f32 %v539, %v555
    %s558 = scalar_lea.vmem [#allocation3], 40
    %v559 = vld [vmem:[%s558] sm:$0xff]
    %561 = vrot.lane.b32.xlu0 %v557, 64
    %v562 = vpop.permute.xlu0 %561
    %v563 = vsel %vm51, %v562, 0
    %565 = vmatprep.subr.mxu0 0.0
    %566 = vmatpush1.msra.mxu0 0.0
    %567 = vmatprep.subr.mxu0 0.0
    %568 = vmatpush1.msra.mxu0 0.0
    %569 = vmatprep.subr.mxu0 0.0
    %570 = vmatpush1.msra.mxu0 0.0
    %571 = vmatprep.subr.mxu0 0.0
    %572 = vmatpush1.msra.mxu0 0.0
    %573 = vmatprep.subr.mxu0 0.0
    %574 = vmatpush1.msra.mxu0 0.0
    %575 = vmatprep.subr.mxu0 0.0
    %576 = vmatpush1.msra.mxu0 0.0
    %577 = vmatprep.subr.mxu0 0.0
    %578 = vmatpush1.msra.mxu0 0.0
    %579 = vmatprep.subr.mxu0 0.0
    %580 = vmatpush1.msra.mxu0 0.0
    %581 = vmatprep.subr.mxu0 0.0
    %582 = vmatpush1.msra.mxu0 0.0
    %583 = vmatprep.subr.mxu0 0.0
    %584 = vmatpush1.msra.mxu0 0.0
    %585 = vmatprep.subr.mxu0 0.0
    %586 = vmatpush1.msra.mxu0 0.0
    %587 = vmatprep.subr.mxu0 0.0
    %588 = vmatpush1.msra.mxu0 0.0
    %589 = vmatprep.subr.mxu0 0.0
    %590 = vmatpush1.msra.mxu0 %v49
    %591 = vmatprep.subr.mxu0 0.0
    %592 = vmatpush1.msra.mxu0 %v48
    %593 = vmatprep.subr.mxu0 0.0
    %594 = vmatpush1.msra.mxu0 %v47
    %595 = vmatprep.subr.mxu0 0.0
    %596 = vmatpush1.msra.mxu0 %v46
    %597 = vmatprep.subr.mxu0 0.0
    %598 = vmatpush2.msra.mxu0 0.0
    %599 = vmatprep.subr.mxu0 0.0
    %600 = vmatpush2.msra.mxu0 0.0
    %601 = vmatprep.subr.mxu0 0.0
    %602 = vmatpush2.msra.mxu0 0.0
    %603 = vmatprep.subr.mxu0 0.0
    %604 = vmatpush2.msra.mxu0 0.0
    %605 = vmatprep.subr.mxu0 0.0
    %606 = vmatpush2.msra.mxu0 0.0
    %607 = vmatprep.subr.mxu0 0.0
    %608 = vmatpush2.msra.mxu0 0.0
    %609 = vmatprep.subr.mxu0 0.0
    %610 = vmatpush2.msra.mxu0 0.0
    %611 = vmatprep.subr.mxu0 0.0
    %612 = vmatpush2.msra.mxu0 0.0
    %613 = vmatprep.subr.mxu0 0.0
    %614 = vmatpush2.msra.mxu0 0.0
    %615 = vmatprep.subr.mxu0 0.0
    %616 = vmatpush2.msra.mxu0 0.0
    %617 = vmatprep.subr.mxu0 0.0
    %618 = vmatpush2.msra.mxu0 0.0
    %619 = vmatprep.subr.mxu0 0.0
    %620 = vmatpush2.msra.mxu0 0.0
    %621 = vmatprep.subr.mxu0 0.0
    %622 = vmatpush2.msra.mxu0 0.0
    %623 = vmatprep.subr.mxu0 0.0
    %624 = vmatpush2.msra.mxu0 0.0
    %625 = vmatprep.subr.mxu0 0.0
    %626 = vmatpush2.msra.mxu0 0.0
    %627 = vmatprep.subr.mxu0 0.0
    %628 = vmatpush2.msra.mxu0 0.0
    %629 = vmatprep.mubr.f32.mxu0 0.0
    %630 = vmatmul.mubr.f32.gmra.mxu0 %v563
    %v631 = vpop.f32.mrf.mxu0
    %v632 = vadd.f32 0.0, %v631
    %v633 = vpop.f32.mrf.mxu0
    %634 = vdwg.mxu0
    %v635 = vadd.f32 %v559, %v632
    %v636 = vxor.u32 %v635, 2147483648
    %v637 = vmul.f32 %v636, 1.442695
    %v638 = vpow.pop %v637
    %v639 = vadd.f32 %v638, 1.0
    %v640 = vrcp.pop %v639
    %v641 = vmul.f32 1.0, %v640
    %v642 = vtanh.pop %v635
    %v643 = vmul.f32 %v641, %v551
    %645 = vrot.lane.b32.xlu0 %v642, 32
    %v646 = vpop.permute.xlu0 %645
    %v648 = vmul.f32 %v641, %v646
    %650 = vrot.lane.b32.xlu0 %v648, 32
    %v651 = vpop.permute.xlu0 %650
    %v653 = vadd.f32 %v643, %v651
    %v654 = vtanh.pop %v653
    %656 = vrot.lane.b32.xlu0 %v654, 32
    %v657 = vpop.permute.xlu0 %656
    %v659 = vmul.f32 %v641, %v657
    %s660 = scalar_lea.vmem [#allocation3], 48
    %v661 = vld [vmem:[%s660] sm:$0xff]
    %663 = vrot.lane.b32.xlu0 %v659, 64
    %v664 = vpop.permute.xlu0 %663
    %v665 = vsel %vm51, %v664, 0
    %667 = vmatprep.subr.mxu0 0.0
    %668 = vmatpush1.msra.mxu0 0.0
    %669 = vmatprep.subr.mxu0 0.0
    %670 = vmatpush1.msra.mxu0 0.0
    %671 = vmatprep.subr.mxu0 0.0
    %672 = vmatpush1.msra.mxu0 0.0
    %673 = vmatprep.subr.mxu0 0.0
    %674 = vmatpush1.msra.mxu0 0.0
    %675 = vmatprep.subr.mxu0 0.0
    %676 = vmatpush1.msra.mxu0 0.0
    %677 = vmatprep.subr.mxu0 0.0
    %678 = vmatpush1.msra.mxu0 0.0
    %679 = vmatprep.subr.mxu0 0.0
    %680 = vmatpush1.msra.mxu0 0.0
    %681 = vmatprep.subr.mxu0 0.0
    %682 = vmatpush1.msra.mxu0 0.0
    %683 = vmatprep.subr.mxu0 0.0
    %684 = vmatpush1.msra.mxu0 0.0
    %685 = vmatprep.subr.mxu0 0.0
    %686 = vmatpush1.msra.mxu0 0.0
    %687 = vmatprep.subr.mxu0 0.0
    %688 = vmatpush1.msra.mxu0 0.0
    %689 = vmatprep.subr.mxu0 0.0
    %690 = vmatpush1.msra.mxu0 0.0
    %691 = vmatprep.subr.mxu0 0.0
    %692 = vmatpush1.msra.mxu0 %v49
    %693 = vmatprep.subr.mxu0 0.0
    %694 = vmatpush1.msra.mxu0 %v48
    %695 = vmatprep.subr.mxu0 0.0
    %696 = vmatpush1.msra.mxu0 %v47
    %697 = vmatprep.subr.mxu0 0.0
    %698 = vmatpush1.msra.mxu0 %v46
    %699 = vmatprep.subr.mxu0 0.0
    %700 = vmatpush2.msra.mxu0 0.0
    %701 = vmatprep.subr.mxu0 0.0
    %702 = vmatpush2.msra.mxu0 0.0
    %703 = vmatprep.subr.mxu0 0.0
    %704 = vmatpush2.msra.mxu0 0.0
    %705 = vmatprep.subr.mxu0 0.0
    %706 = vmatpush2.msra.mxu0 0.0
    %707 = vmatprep.subr.mxu0 0.0
    %708 = vmatpush2.msra.mxu0 0.0
    %709 = vmatprep.subr.mxu0 0.0
    %710 = vmatpush2.msra.mxu0 0.0
    %711 = vmatprep.subr.mxu0 0.0
    %712 = vmatpush2.msra.mxu0 0.0
    %713 = vmatprep.subr.mxu0 0.0
    %714 = vmatpush2.msra.mxu0 0.0
    %715 = vmatprep.subr.mxu0 0.0
    %716 = vmatpush2.msra.mxu0 0.0
    %717 = vmatprep.subr.mxu0 0.0
    %718 = vmatpush2.msra.mxu0 0.0
    %719 = vmatprep.subr.mxu0 0.0
    %720 = vmatpush2.msra.mxu0 0.0
    %721 = vmatprep.subr.mxu0 0.0
    %722 = vmatpush2.msra.mxu0 0.0
    %723 = vmatprep.subr.mxu0 0.0
    %724 = vmatpush2.msra.mxu0 0.0
    %725 = vmatprep.subr.mxu0 0.0
    %726 = vmatpush2.msra.mxu0 0.0
    %727 = vmatprep.subr.mxu0 0.0
    %728 = vmatpush2.msra.mxu0 0.0
    %729 = vmatprep.subr.mxu0 0.0
    %730 = vmatpush2.msra.mxu0 0.0
    %731 = vmatprep.mubr.f32.mxu0 0.0
    %732 = vmatmul.mubr.f32.gmra.mxu0 %v665
    %v733 = vpop.f32.mrf.mxu0
    %v734 = vadd.f32 0.0, %v733
    %v735 = vpop.f32.mrf.mxu0
    %736 = vdwg.mxu0
    %v737 = vadd.f32 %v661, %v734
    %v738 = vxor.u32 %v737, 2147483648
    %v739 = vmul.f32 %v738, 1.442695
    %v740 = vpow.pop %v739
    %v741 = vadd.f32 %v740, 1.0
    %v742 = vrcp.pop %v741
    %v743 = vmul.f32 1.0, %v742
    %v744 = vtanh.pop %v737
    %v745 = vmul.f32 %v743, %v653
    %747 = vrot.lane.b32.xlu0 %v744, 32
    %v748 = vpop.permute.xlu0 %747
    %v750 = vmul.f32 %v743, %v748
    %752 = vrot.lane.b32.xlu0 %v750, 32
    %v753 = vpop.permute.xlu0 %752
    %v755 = vadd.f32 %v745, %v753
    %v756 = vtanh.pop %v755
    %758 = vrot.lane.b32.xlu0 %v756, 32
    %v759 = vpop.permute.xlu0 %758
    %v761 = vmul.f32 %v743, %v759
    %s762 = scalar_lea.vmem [#allocation3], 56
    %v763 = vld [vmem:[%s762] sm:$0xff]
    %765 = vrot.lane.b32.xlu0 %v761, 64
    %v766 = vpop.permute.xlu0 %765
    %v767 = vsel %vm51, %v766, 0
    %769 = vmatprep.subr.mxu0 0.0
    %770 = vmatpush1.msra.mxu0 0.0
    %771 = vmatprep.subr.mxu0 0.0
    %772 = vmatpush1.msra.mxu0 0.0
    %773 = vmatprep.subr.mxu0 0.0
    %774 = vmatpush1.msra.mxu0 0.0
    %775 = vmatprep.subr.mxu0 0.0
    %776 = vmatpush1.msra.mxu0 0.0
    %777 = vmatprep.subr.mxu0 0.0
    %778 = vmatpush1.msra.mxu0 0.0
    %779 = vmatprep.subr.mxu0 0.0
    %780 = vmatpush1.msra.mxu0 0.0
    %781 = vmatprep.subr.mxu0 0.0
    %782 = vmatpush1.msra.mxu0 0.0
    %783 = vmatprep.subr.mxu0 0.0
    %784 = vmatpush1.msra.mxu0 0.0
    %785 = vmatprep.subr.mxu0 0.0
    %786 = vmatpush1.msra.mxu0 0.0
    %787 = vmatprep.subr.mxu0 0.0
    %788 = vmatpush1.msra.mxu0 0.0
    %789 = vmatprep.subr.mxu0 0.0
    %790 = vmatpush1.msra.mxu0 0.0
    %791 = vmatprep.subr.mxu0 0.0
    %792 = vmatpush1.msra.mxu0 0.0
    %793 = vmatprep.subr.mxu0 0.0
    %794 = vmatpush1.msra.mxu0 %v49
    %795 = vmatprep.subr.mxu0 0.0
    %796 = vmatpush1.msra.mxu0 %v48
    %797 = vmatprep.subr.mxu0 0.0
    %798 = vmatpush1.msra.mxu0 %v47
    %799 = vmatprep.subr.mxu0 0.0
    %800 = vmatpush1.msra.mxu0 %v46
    %801 = vmatprep.subr.mxu0 0.0
    %802 = vmatpush2.msra.mxu0 0.0
    %803 = vmatprep.subr.mxu0 0.0
    %804 = vmatpush2.msra.mxu0 0.0
    %805 = vmatprep.subr.mxu0 0.0
    %806 = vmatpush2.msra.mxu0 0.0
    %807 = vmatprep.subr.mxu0 0.0
    %808 = vmatpush2.msra.mxu0 0.0
    %809 = vmatprep.subr.mxu0 0.0
    %810 = vmatpush2.msra.mxu0 0.0
    %811 = vmatprep.subr.mxu0 0.0
    %812 = vmatpush2.msra.mxu0 0.0
    %813 = vmatprep.subr.mxu0 0.0
    %814 = vmatpush2.msra.mxu0 0.0
    %815 = vmatprep.subr.mxu0 0.0
    %816 = vmatpush2.msra.mxu0 0.0
    %817 = vmatprep.subr.mxu0 0.0
    %818 = vmatpush2.msra.mxu0 0.0
    %819 = vmatprep.subr.mxu0 0.0
    %820 = vmatpush2.msra.mxu0 0.0
    %821 = vmatprep.subr.mxu0 0.0
    %822 = vmatpush2.msra.mxu0 0.0
    %823 = vmatprep.subr.mxu0 0.0
    %824 = vmatpush2.msra.mxu0 0.0
    %825 = vmatprep.subr.mxu0 0.0
    %826 = vmatpush2.msra.mxu0 0.0
    %827 = vmatprep.subr.mxu0 0.0
    %828 = vmatpush2.msra.mxu0 0.0
    %829 = vmatprep.subr.mxu0 0.0
    %830 = vmatpush2.msra.mxu0 0.0
    %831 = vmatprep.subr.mxu0 0.0
    %832 = vmatpush2.msra.mxu0 0.0
    %833 = vmatprep.mubr.f32.mxu0 0.0
    %834 = vmatmul.mubr.f32.gmra.mxu0 %v767
    %v835 = vpop.f32.mrf.mxu0
    %v836 = vadd.f32 0.0, %v835
    %v837 = vpop.f32.mrf.mxu0
    %838 = vdwg.mxu0
    %v839 = vadd.f32 %v763, %v836
    %v840 = vxor.u32 %v839, 2147483648
    %v841 = vmul.f32 %v840, 1.442695
    %v842 = vpow.pop %v841
    %v843 = vadd.f32 %v842, 1.0
    %v844 = vrcp.pop %v843
    %v845 = vmul.f32 1.0, %v844
    %v846 = vtanh.pop %v839
    %v847 = vmul.f32 %v845, %v755
    %849 = vrot.lane.b32.xlu0 %v846, 32
    %v850 = vpop.permute.xlu0 %849
    %v852 = vmul.f32 %v845, %v850
    %854 = vrot.lane.b32.xlu0 %v852, 32
    %v855 = vpop.permute.xlu0 %854
    %v857 = vadd.f32 %v847, %v855
    %v858 = vtanh.pop %v857
    %860 = vrot.lane.b32.xlu0 %v858, 32
    %v861 = vpop.permute.xlu0 %860
    %v863 = vmul.f32 %v845, %v861
    %v864 = vld [vmem:[%s2] sm:$0x1]
    %v866 = vlaneseq
    %v867 = vshrl.u32 %v866, 7
    %v868 = vsub.s32 0, %v867
    %v869 = vrot.slane %v864, %v868
    %870 = vrot.lane.b32.xlu0 %v869, 64
    %v871 = vpop.permute.xlu0 %870
    %v873 = vmul.f32 %v863, %v871
    %875 = vrot.lane.b32.xlu0 %v873, 64
    %v876 = vpop.permute.xlu0 %875
    %v878 = vsel %vm51, %v876, 0.0
    %879 = vadd.xlane.f32.xlu0 %v878
    %v880 = vpop.xlane.xlu0 %879
    %s881 = sld [smem:[#allocation2]]
    %v882 = vstv %s881
    %v883 = vadd.f32 %v880, %v882
    %vm884 = vcmask 7168
    %885 = vst.msk [vmem:[%s4] sm:$0xff] %vm884, %v883
    // Predicated region
    $region26: #{tpu_custom_call.1} parent=1 // pred_check
      _
    $region27: #{tpu_custom_call.1} parent=1 // pred_check_branch
      %887 = sbr.rel (0) target = $region29
    $region28: #{tpu_custom_call.1} parent=1 // pred_region
      _
    $region29: #{tpu_custom_call.1} parent=1 // pred_fallthru
      _
    // Predicated region
    $region30: #{tpu_custom_call.1} parent=1 // pred_check
      _
    $region31: #{tpu_custom_call.1} parent=1 // pred_check_branch
      %889 = sbr.rel (0) target = $region33
    $region32: #{tpu_custom_call.1} parent=1 // pred_region
      _
    $region33: #{tpu_custom_call.1} parent=1 // pred_fallthru
      _
    %890 = vsyncpa [#allocation4], 1
    %891 = vsyncpa [#allocation6], 1

</llo_original>
